<compile_context>
chip_gen: v6e
topology: v6e:2x2x1
jax: 0.10.0
libtpu: 0.0.40
codegen_flags: <defaults>
</compile_context>

<pallas_src>
import math

import jax
import jax.numpy as jnp
from jax.experimental import pallas as pl
from jax.experimental.pallas import tpu as pltpu


def _round_up(x, m):
    return ((x + m - 1) // m) * m


# ----------------------------- fused Pallas kernel -------------------------- #

def make_lstm_layer0_fc_kernel(T, Bp, H, O, Op):
    """Kernel computing layer 0 of the LSTM stack with zero (h0, c0), then
    fc(hn[0]) into a lane-dense (Bp, Op) output.

    Ref layout (all whole-array VMEM, grid=()):
      x_ref   : (T*Bp, Din)  time-major input, batch padded to Bp
      wih_ref : (Din, 4H)    layer-0 input weights, pre-transposed
      whh_ref : (H, 4H)      layer-0 recurrent weights, pre-transposed
      b_ref   : (1, 4H)      b_ih + b_hh pre-summed
      fcw_ref : (1, H) if O == 1 (reduction head) else (H, Op)
      fcb_ref : (1, Op)
      out_ref : (Bp, Op)     fc(hn[0]), lane-dense
    """

    def kernel(x_ref, wih_ref, whh_ref, b_ref, fcw_ref, fcb_ref, out_ref):
        # Hoist all weight/bias reads into vregs once.
        wih = wih_ref[...]                                   # (Din, 4H)
        whh = whh_ref[...]                                   # (H, 4H)
        b = b_ref[...]                                       # (1, 4H)

        # Hoisted input projection over the whole sequence (no recurrent
        # dependency): one big MXU matmul, bias folded in here.
        gx = jnp.dot(x_ref[...], wih,
                     preferred_element_type=jnp.float32) + b  # (T*Bp, 4H)

        # Lane mask selecting the tanh gate (PyTorch order [i, f, g, o] ->
        # lanes [2H, 3H) are the cell candidate g).  Precomputed outside the
        # time loop; sigmoid / tanh are then each applied once per step to the
        # full lane-dense (Bp, 4H) block.
        lane = jax.lax.broadcasted_iota(jnp.int32, (Bp, 4 * H), 1)
        tanh_mask = (lane >= 2 * H) & (lane < 3 * H)

        h = jnp.zeros((Bp, H), jnp.float32)
        c = jnp.zeros((Bp, H), jnp.float32)

        # Serial recurrence, fully unrolled (T is small and static).
        # Per step: 1 small MXU matmul + 2 full-width EUP ops (+ tanh(c)).
        for t in range(T):
            gates = gx[t * Bp:(t + 1) * Bp, :] + jnp.dot(
                h, whh, preferred_element_type=jnp.float32)   # (Bp, 4H)
            # TODO(synk): if jax.nn.sigmoid lowers to exp + full-precision
            # divide, hand-roll as exp(-x), 1+x, pl.reciprocal(approx=True)
            # (kept exact here for the 1e-4 parity check).
            act = jnp.where(tanh_mask, jnp.tanh(gates), jax.nn.sigmoid(gates))
            i_g = act[:, 0 * H:1 * H]
            f_g = act[:, 1 * H:2 * H]
            g_g = act[:, 2 * H:3 * H]
            o_g = act[:, 3 * H:4 * H]
            c = f_g * c + i_g * g_g
            h = o_g * jnp.tanh(c)

        # fc head on hn[0] = h (layer 0 final hidden state).
        if O == 1:
            # VPU multiply + lane reduction instead of an MXU matmul that
            # would compute 127 zero columns; broadcast to a lane-dense store.
            prod = h * fcw_ref[...]                           # (Bp, H)
            red = jnp.sum(prod, axis=1, keepdims=True)        # (Bp, 1)
            out_ref[...] = jnp.broadcast_to(red, (Bp, Op)) + fcb_ref[...]
        else:
            out_ref[...] = (jnp.dot(h, fcw_ref[...],
                                    preferred_element_type=jnp.float32)
                            + fcb_ref[...])

    return kernel


# ------------------------------ JAX wrapper --------------------------------- #

def lstm_forward(x, params):
    """Reproduces LSTM.forward: multi-layer LSTM with zero (h0, c0), then
    fc(hn[0]) and squeeze.  x: (B, T, input_dim).

    Since the head consumes hn[0] (layer 0's final hidden state), layers >= 1
    of the stack never affect the output; only layer 0's weights are passed to
    the kernel.
    """
    B, T, Din = x.shape
    H = params["lstm"][0]["w_hh"].shape[1]
    O = params["fc_w"].shape[0]

    Bp = _round_up(max(B, 8), 8)          # fp32 sublane tile
    Op = _round_up(max(O, 128), 128)      # lane-dense fc output

    # (B,T,Din) -> time-major (T,B,Din) -> pad batch -> flatten to (T*Bp, Din).
    x_t = jnp.transpose(x, (1, 0, 2)).astype(jnp.float32)
    x_p = jnp.pad(x_t, ((0, 0), (0, Bp - B), (0, 0))).reshape(T * Bp, Din)

    lp0 = params["lstm"][0]
    wih0 = jnp.asarray(lp0["w_ih"], jnp.float32).T            # (Din, 4H)
    whh0 = jnp.asarray(lp0["w_hh"], jnp.float32).T            # (H, 4H)
    b0 = (lp0["b_ih"] + lp0["b_hh"]).astype(jnp.float32)[None, :]   # (1, 4H)

    if O == 1:
        fcw_p = jnp.asarray(params["fc_w"], jnp.float32)      # (1, H)
    else:
        fcw_p = jnp.zeros((H, Op), jnp.float32).at[:, :O].set(
            jnp.asarray(params["fc_w"], jnp.float32).T)
    fcb_p = jnp.zeros((1, Op), jnp.float32).at[0, :O].set(
        jnp.asarray(params["fc_b"], jnp.float32))

    vmem = pl.BlockSpec(memory_space=pltpu.MemorySpace.VMEM)
    kernel = make_lstm_layer0_fc_kernel(T, Bp, H, O, Op)

    out_p = pl.pallas_call(
        kernel,
        out_shape=jax.ShapeDtypeStruct((Bp, Op), jnp.float32),
        in_specs=[vmem] * 6,
        out_specs=vmem,
        # Whole problem is a few KB -> whole-array VMEM residency, grid=().
    )(x_p, wih0, whh0, b0, fcw_p, fcb_p)

    return jnp.squeeze(out_p[:B, :O])


# ------------------------ deterministic parameter init ---------------------- #

def init_params(key, input_dim, hidden_dim, num_layers, output_dim):
    """Mimics PyTorch default init: U(-1/sqrt(hidden), 1/sqrt(hidden))."""
    k_lstm = 1.0 / math.sqrt(hidden_dim)
    k_fc = 1.0 / math.sqrt(hidden_dim)
    params = {"lstm": []}
    for layer in range(num_layers):
        in_dim = input_dim if layer == 0 else hidden_dim
        key, k1, k2, k3, k4 = jax.random.split(key, 5)
        params["lstm"].append({
            "w_ih": jax.random.uniform(k1, (4 * hidden_dim, in_dim),
                                       jnp.float32, -k_lstm, k_lstm),
            "w_hh": jax.random.uniform(k2, (4 * hidden_dim, hidden_dim),
                                       jnp.float32, -k_lstm, k_lstm),
            "b_ih": jax.random.uniform(k3, (4 * hidden_dim,),
                                       jnp.float32, -k_lstm, k_lstm),
            "b_hh": jax.random.uniform(k4, (4 * hidden_dim,),
                                       jnp.float32, -k_lstm, k_lstm),
        })
    key, k5, k6 = jax.random.split(key, 3)
    params["fc_w"] = jax.random.uniform(k5, (output_dim, hidden_dim),
                                        jnp.float32, -k_fc, k_fc)
    params["fc_b"] = jax.random.uniform(k6, (output_dim,),
                                        jnp.float32, -k_fc, k_fc)
    return params


# ------------------------------ pure-JAX reference --------------------------- #

def lstm_forward_ref(x, params):
    """Runs the FULL multi-layer stack (like nn.LSTM) and applies fc(hn[0]),
    proving that dropping layers >= 1 in the kernel preserves semantics."""
    B = x.shape[0]
    hn0 = None
    layer_in = x.astype(jnp.float32)
    for layer_idx, lp in enumerate(params["lstm"]):
        H = lp["w_hh"].shape[1]
        h = jnp.zeros((B, H), jnp.float32)
        c = jnp.zeros((B, H), jnp.float32)
        outs = []
        for t in range(layer_in.shape[1]):
            g = (layer_in[:, t, :] @ lp["w_ih"].T + lp["b_ih"]
                 + h @ lp["w_hh"].T + lp["b_hh"])
            i = jax.nn.sigmoid(g[:, 0 * H:1 * H])
            f = jax.nn.sigmoid(g[:, 1 * H:2 * H])
            gg = jnp.tanh(g[:, 2 * H:3 * H])
            o = jax.nn.sigmoid(g[:, 3 * H:4 * H])
            c = f * c + i * gg
            h = o * jnp.tanh(c)
            outs.append(h)
        if layer_idx == 0:
            hn0 = h
        layer_in = jnp.stack(outs, axis=1)
    out = hn0 @ params["fc_w"].T + params["fc_b"]
    return jnp.squeeze(out)


# ------------------------------------ main ---------------------------------- #

if __name__ == "__main__":
    batch, seq, input_dim, hidden_dim, num_layers, output_dim = 2, 8, 16, 32, 2, 1

    key = jax.random.PRNGKey(0)
    key, xkey = jax.random.split(key)
    x = jax.random.normal(xkey, (batch, seq, input_dim), jnp.float32)

    params = init_params(key, input_dim, hidden_dim, num_layers, output_dim)

    y = lstm_forward(x, params)
    y = jax.block_until_ready(y)

    y_ref = lstm_forward_ref(x, params)
    assert y.shape == y_ref.shape
    assert jnp.allclose(y, y_ref, atol=1e-4, rtol=1e-4)

    print("KERNEL_OK")
</pallas_src>

<mosaic_0001>
module attributes {stable_mosaic.version = 11 : i64} {
  func.func @kernel(%arg0: memref<64x16xf32, #tpu.memory_space<vmem>>, %arg1: memref<16x128xf32, #tpu.memory_space<vmem>>, %arg2: memref<32x128xf32, #tpu.memory_space<vmem>>, %arg3: memref<1x128xf32, #tpu.memory_space<vmem>>, %arg4: memref<1x32xf32, #tpu.memory_space<vmem>>, %arg5: memref<1x128xf32, #tpu.memory_space<vmem>>, %arg6: memref<8x128xf32, #tpu.memory_space<vmem>>) attributes {dimension_semantics = [], scalar_prefetch = 0 : i64, scratch_operands = 0 : i64, tpu.core_type = #tpu.core_type<tc>} {
    %c0 = arith.constant 0 : index
    %c0_0 = arith.constant 0 : index
    %0 = vector.load %arg1[%c0, %c0_0] : memref<16x128xf32, #tpu.memory_space<vmem>>, vector<16x128xf32>
    %c0_1 = arith.constant 0 : index
    %c0_2 = arith.constant 0 : index
    %1 = vector.load %arg2[%c0_1, %c0_2] : memref<32x128xf32, #tpu.memory_space<vmem>>, vector<32x128xf32>
    %c0_3 = arith.constant 0 : index
    %c0_4 = arith.constant 0 : index
    %2 = vector.load %arg3[%c0_3, %c0_4] : memref<1x128xf32, #tpu.memory_space<vmem>>, vector<1x128xf32>
    %c0_5 = arith.constant 0 : index
    %c0_6 = arith.constant 0 : index
    %3 = vector.load %arg0[%c0_5, %c0_6] : memref<64x16xf32, #tpu.memory_space<vmem>>, vector<64x16xf32>
    %cst = arith.constant dense<0.000000e+00> : vector<64x128xf32>
    %4 = tpu.matmul %3, %0, %cst {dimension_numbers = #tpu.dot_dimension_numbers<[1], [0], [0], [1], [0, 0, 1, 1], [], []>} : vector<64x16xf32>, vector<16x128xf32>, vector<64x128xf32> -> vector<64x128xf32>
    %5 = vector.broadcast %2 : vector<1x128xf32> to vector<64x128xf32>
    %6 = arith.addf %4, %5 : vector<64x128xf32>
    %7 = tpu.iota {dimensions = array<i32: 1>} : vector<8x128xi32>
    %c64_i32 = arith.constant 64 : i32
    %8 = vector.broadcast %c64_i32 : i32 to vector<8x128xi32>
    %9 = arith.cmpi sge, %7, %8 : vector<8x128xi32>
    %c96_i32 = arith.constant 96 : i32
    %10 = vector.broadcast %c96_i32 : i32 to vector<8x128xi32>
    %11 = arith.cmpi slt, %7, %10 : vector<8x128xi32>
    %12 = arith.andi %9, %11 : vector<8x128xi1>
    %cst_7 = arith.constant 0.000000e+00 : f32
    %13 = vector.broadcast %cst_7 : f32 to vector<8x32xf32>
    %cst_8 = arith.constant 0.000000e+00 : f32
    %14 = vector.broadcast %cst_8 : f32 to vector<8x32xf32>
    %15 = vector.extract_strided_slice %6 {offsets = [0, 0], sizes = [8, 128], strides = [1, 1]} : vector<64x128xf32> to vector<8x128xf32>
    %cst_9 = arith.constant dense<0.000000e+00> : vector<8x128xf32>
    %16 = tpu.matmul %13, %1, %cst_9 {dimension_numbers = #tpu.dot_dimension_numbers<[1], [0], [0], [1], [0, 0, 1, 1], [], []>} : vector<8x32xf32>, vector<32x128xf32>, vector<8x128xf32> -> vector<8x128xf32>
    %17 = arith.addf %15, %16 : vector<8x128xf32>
    %18 = math.tanh %17 : vector<8x128xf32>
    %19 = arith.negf %17 : vector<8x128xf32>
    %20 = math.exp %19 : vector<8x128xf32>
    %cst_10 = arith.constant 1.000000e+00 : f32
    %21 = vector.broadcast %cst_10 : f32 to vector<8x128xf32>
    %22 = arith.addf %21, %20 : vector<8x128xf32>
    %23 = arith.divf %21, %22 : vector<8x128xf32>
    %24 = arith.select %12, %18, %23 : vector<8x128xi1>, vector<8x128xf32>
    %25 = vector.extract_strided_slice %24 {offsets = [0, 0], sizes = [8, 32], strides = [1, 1]} : vector<8x128xf32> to vector<8x32xf32>
    %26 = vector.extract_strided_slice %24 {offsets = [0, 32], sizes = [8, 32], strides = [1, 1]} : vector<8x128xf32> to vector<8x32xf32>
    %27 = vector.extract_strided_slice %24 {offsets = [0, 64], sizes = [8, 32], strides = [1, 1]} : vector<8x128xf32> to vector<8x32xf32>
    %28 = vector.extract_strided_slice %24 {offsets = [0, 96], sizes = [8, 32], strides = [1, 1]} : vector<8x128xf32> to vector<8x32xf32>
    %29 = arith.mulf %26, %14 : vector<8x32xf32>
    %30 = arith.mulf %25, %27 : vector<8x32xf32>
    %31 = arith.addf %29, %30 : vector<8x32xf32>
    %32 = math.tanh %31 : vector<8x32xf32>
    %33 = arith.mulf %28, %32 : vector<8x32xf32>
    %34 = vector.extract_strided_slice %6 {offsets = [8, 0], sizes = [8, 128], strides = [1, 1]} : vector<64x128xf32> to vector<8x128xf32>
    %cst_11 = arith.constant dense<0.000000e+00> : vector<8x128xf32>
    %35 = tpu.matmul %33, %1, %cst_11 {dimension_numbers = #tpu.dot_dimension_numbers<[1], [0], [0], [1], [0, 0, 1, 1], [], []>} : vector<8x32xf32>, vector<32x128xf32>, vector<8x128xf32> -> vector<8x128xf32>
    %36 = arith.addf %34, %35 : vector<8x128xf32>
    %37 = math.tanh %36 : vector<8x128xf32>
    %38 = arith.negf %36 : vector<8x128xf32>
    %39 = math.exp %38 : vector<8x128xf32>
    %cst_12 = arith.constant 1.000000e+00 : f32
    %40 = vector.broadcast %cst_12 : f32 to vector<8x128xf32>
    %41 = arith.addf %40, %39 : vector<8x128xf32>
    %42 = arith.divf %40, %41 : vector<8x128xf32>
    %43 = arith.select %12, %37, %42 : vector<8x128xi1>, vector<8x128xf32>
    %44 = vector.extract_strided_slice %43 {offsets = [0, 0], sizes = [8, 32], strides = [1, 1]} : vector<8x128xf32> to vector<8x32xf32>
    %45 = vector.extract_strided_slice %43 {offsets = [0, 32], sizes = [8, 32], strides = [1, 1]} : vector<8x128xf32> to vector<8x32xf32>
    %46 = vector.extract_strided_slice %43 {offsets = [0, 64], sizes = [8, 32], strides = [1, 1]} : vector<8x128xf32> to vector<8x32xf32>
    %47 = vector.extract_strided_slice %43 {offsets = [0, 96], sizes = [8, 32], strides = [1, 1]} : vector<8x128xf32> to vector<8x32xf32>
    %48 = arith.mulf %45, %31 : vector<8x32xf32>
    %49 = arith.mulf %44, %46 : vector<8x32xf32>
    %50 = arith.addf %48, %49 : vector<8x32xf32>
    %51 = math.tanh %50 : vector<8x32xf32>
    %52 = arith.mulf %47, %51 : vector<8x32xf32>
    %53 = vector.extract_strided_slice %6 {offsets = [16, 0], sizes = [8, 128], strides = [1, 1]} : vector<64x128xf32> to vector<8x128xf32>
    %cst_13 = arith.constant dense<0.000000e+00> : vector<8x128xf32>
    %54 = tpu.matmul %52, %1, %cst_13 {dimension_numbers = #tpu.dot_dimension_numbers<[1], [0], [0], [1], [0, 0, 1, 1], [], []>} : vector<8x32xf32>, vector<32x128xf32>, vector<8x128xf32> -> vector<8x128xf32>
    %55 = arith.addf %53, %54 : vector<8x128xf32>
    %56 = math.tanh %55 : vector<8x128xf32>
    %57 = arith.negf %55 : vector<8x128xf32>
    %58 = math.exp %57 : vector<8x128xf32>
    %cst_14 = arith.constant 1.000000e+00 : f32
    %59 = vector.broadcast %cst_14 : f32 to vector<8x128xf32>
    %60 = arith.addf %59, %58 : vector<8x128xf32>
    %61 = arith.divf %59, %60 : vector<8x128xf32>
    %62 = arith.select %12, %56, %61 : vector<8x128xi1>, vector<8x128xf32>
    %63 = vector.extract_strided_slice %62 {offsets = [0, 0], sizes = [8, 32], strides = [1, 1]} : vector<8x128xf32> to vector<8x32xf32>
    %64 = vector.extract_strided_slice %62 {offsets = [0, 32], sizes = [8, 32], strides = [1, 1]} : vector<8x128xf32> to vector<8x32xf32>
    %65 = vector.extract_strided_slice %62 {offsets = [0, 64], sizes = [8, 32], strides = [1, 1]} : vector<8x128xf32> to vector<8x32xf32>
    %66 = vector.extract_strided_slice %62 {offsets = [0, 96], sizes = [8, 32], strides = [1, 1]} : vector<8x128xf32> to vector<8x32xf32>
    %67 = arith.mulf %64, %50 : vector<8x32xf32>
    %68 = arith.mulf %63, %65 : vector<8x32xf32>
    %69 = arith.addf %67, %68 : vector<8x32xf32>
    %70 = math.tanh %69 : vector<8x32xf32>
    %71 = arith.mulf %66, %70 : vector<8x32xf32>
    %72 = vector.extract_strided_slice %6 {offsets = [24, 0], sizes = [8, 128], strides = [1, 1]} : vector<64x128xf32> to vector<8x128xf32>
    %cst_15 = arith.constant dense<0.000000e+00> : vector<8x128xf32>
    %73 = tpu.matmul %71, %1, %cst_15 {dimension_numbers = #tpu.dot_dimension_numbers<[1], [0], [0], [1], [0, 0, 1, 1], [], []>} : vector<8x32xf32>, vector<32x128xf32>, vector<8x128xf32> -> vector<8x128xf32>
    %74 = arith.addf %72, %73 : vector<8x128xf32>
    %75 = math.tanh %74 : vector<8x128xf32>
    %76 = arith.negf %74 : vector<8x128xf32>
    %77 = math.exp %76 : vector<8x128xf32>
    %cst_16 = arith.constant 1.000000e+00 : f32
    %78 = vector.broadcast %cst_16 : f32 to vector<8x128xf32>
    %79 = arith.addf %78, %77 : vector<8x128xf32>
    %80 = arith.divf %78, %79 : vector<8x128xf32>
    %81 = arith.select %12, %75, %80 : vector<8x128xi1>, vector<8x128xf32>
    %82 = vector.extract_strided_slice %81 {offsets = [0, 0], sizes = [8, 32], strides = [1, 1]} : vector<8x128xf32> to vector<8x32xf32>
    %83 = vector.extract_strided_slice %81 {offsets = [0, 32], sizes = [8, 32], strides = [1, 1]} : vector<8x128xf32> to vector<8x32xf32>
    %84 = vector.extract_strided_slice %81 {offsets = [0, 64], sizes = [8, 32], strides = [1, 1]} : vector<8x128xf32> to vector<8x32xf32>
    %85 = vector.extract_strided_slice %81 {offsets = [0, 96], sizes = [8, 32], strides = [1, 1]} : vector<8x128xf32> to vector<8x32xf32>
    %86 = arith.mulf %83, %69 : vector<8x32xf32>
    %87 = arith.mulf %82, %84 : vector<8x32xf32>
    %88 = arith.addf %86, %87 : vector<8x32xf32>
    %89 = math.tanh %88 : vector<8x32xf32>
    %90 = arith.mulf %85, %89 : vector<8x32xf32>
    %91 = vector.extract_strided_slice %6 {offsets = [32, 0], sizes = [8, 128], strides = [1, 1]} : vector<64x128xf32> to vector<8x128xf32>
    %cst_17 = arith.constant dense<0.000000e+00> : vector<8x128xf32>
    %92 = tpu.matmul %90, %1, %cst_17 {dimension_numbers = #tpu.dot_dimension_numbers<[1], [0], [0], [1], [0, 0, 1, 1], [], []>} : vector<8x32xf32>, vector<32x128xf32>, vector<8x128xf32> -> vector<8x128xf32>
    %93 = arith.addf %91, %92 : vector<8x128xf32>
    %94 = math.tanh %93 : vector<8x128xf32>
    %95 = arith.negf %93 : vector<8x128xf32>
    %96 = math.exp %95 : vector<8x128xf32>
    %cst_18 = arith.constant 1.000000e+00 : f32
    %97 = vector.broadcast %cst_18 : f32 to vector<8x128xf32>
    %98 = arith.addf %97, %96 : vector<8x128xf32>
    %99 = arith.divf %97, %98 : vector<8x128xf32>
    %100 = arith.select %12, %94, %99 : vector<8x128xi1>, vector<8x128xf32>
    %101 = vector.extract_strided_slice %100 {offsets = [0, 0], sizes = [8, 32], strides = [1, 1]} : vector<8x128xf32> to vector<8x32xf32>
    %102 = vector.extract_strided_slice %100 {offsets = [0, 32], sizes = [8, 32], strides = [1, 1]} : vector<8x128xf32> to vector<8x32xf32>
    %103 = vector.extract_strided_slice %100 {offsets = [0, 64], sizes = [8, 32], strides = [1, 1]} : vector<8x128xf32> to vector<8x32xf32>
    %104 = vector.extract_strided_slice %100 {offsets = [0, 96], sizes = [8, 32], strides = [1, 1]} : vector<8x128xf32> to vector<8x32xf32>
    %105 = arith.mulf %102, %88 : vector<8x32xf32>
    %106 = arith.mulf %101, %103 : vector<8x32xf32>
    %107 = arith.addf %105, %106 : vector<8x32xf32>
    %108 = math.tanh %107 : vector<8x32xf32>
    %109 = arith.mulf %104, %108 : vector<8x32xf32>
    %110 = vector.extract_strided_slice %6 {offsets = [40, 0], sizes = [8, 128], strides = [1, 1]} : vector<64x128xf32> to vector<8x128xf32>
    %cst_19 = arith.constant dense<0.000000e+00> : vector<8x128xf32>
    %111 = tpu.matmul %109, %1, %cst_19 {dimension_numbers = #tpu.dot_dimension_numbers<[1], [0], [0], [1], [0, 0, 1, 1], [], []>} : vector<8x32xf32>, vector<32x128xf32>, vector<8x128xf32> -> vector<8x128xf32>
    %112 = arith.addf %110, %111 : vector<8x128xf32>
    %113 = math.tanh %112 : vector<8x128xf32>
    %114 = arith.negf %112 : vector<8x128xf32>
    %115 = math.exp %114 : vector<8x128xf32>
    %cst_20 = arith.constant 1.000000e+00 : f32
    %116 = vector.broadcast %cst_20 : f32 to vector<8x128xf32>
    %117 = arith.addf %116, %115 : vector<8x128xf32>
    %118 = arith.divf %116, %117 : vector<8x128xf32>
    %119 = arith.select %12, %113, %118 : vector<8x128xi1>, vector<8x128xf32>
    %120 = vector.extract_strided_slice %119 {offsets = [0, 0], sizes = [8, 32], strides = [1, 1]} : vector<8x128xf32> to vector<8x32xf32>
    %121 = vector.extract_strided_slice %119 {offsets = [0, 32], sizes = [8, 32], strides = [1, 1]} : vector<8x128xf32> to vector<8x32xf32>
    %122 = vector.extract_strided_slice %119 {offsets = [0, 64], sizes = [8, 32], strides = [1, 1]} : vector<8x128xf32> to vector<8x32xf32>
    %123 = vector.extract_strided_slice %119 {offsets = [0, 96], sizes = [8, 32], strides = [1, 1]} : vector<8x128xf32> to vector<8x32xf32>
    %124 = arith.mulf %121, %107 : vector<8x32xf32>
    %125 = arith.mulf %120, %122 : vector<8x32xf32>
    %126 = arith.addf %124, %125 : vector<8x32xf32>
    %127 = math.tanh %126 : vector<8x32xf32>
    %128 = arith.mulf %123, %127 : vector<8x32xf32>
    %129 = vector.extract_strided_slice %6 {offsets = [48, 0], sizes = [8, 128], strides = [1, 1]} : vector<64x128xf32> to vector<8x128xf32>
    %cst_21 = arith.constant dense<0.000000e+00> : vector<8x128xf32>
    %130 = tpu.matmul %128, %1, %cst_21 {dimension_numbers = #tpu.dot_dimension_numbers<[1], [0], [0], [1], [0, 0, 1, 1], [], []>} : vector<8x32xf32>, vector<32x128xf32>, vector<8x128xf32> -> vector<8x128xf32>
    %131 = arith.addf %129, %130 : vector<8x128xf32>
    %132 = math.tanh %131 : vector<8x128xf32>
    %133 = arith.negf %131 : vector<8x128xf32>
    %134 = math.exp %133 : vector<8x128xf32>
    %cst_22 = arith.constant 1.000000e+00 : f32
    %135 = vector.broadcast %cst_22 : f32 to vector<8x128xf32>
    %136 = arith.addf %135, %134 : vector<8x128xf32>
    %137 = arith.divf %135, %136 : vector<8x128xf32>
    %138 = arith.select %12, %132, %137 : vector<8x128xi1>, vector<8x128xf32>
    %139 = vector.extract_strided_slice %138 {offsets = [0, 0], sizes = [8, 32], strides = [1, 1]} : vector<8x128xf32> to vector<8x32xf32>
    %140 = vector.extract_strided_slice %138 {offsets = [0, 32], sizes = [8, 32], strides = [1, 1]} : vector<8x128xf32> to vector<8x32xf32>
    %141 = vector.extract_strided_slice %138 {offsets = [0, 64], sizes = [8, 32], strides = [1, 1]} : vector<8x128xf32> to vector<8x32xf32>
    %142 = vector.extract_strided_slice %138 {offsets = [0, 96], sizes = [8, 32], strides = [1, 1]} : vector<8x128xf32> to vector<8x32xf32>
    %143 = arith.mulf %140, %126 : vector<8x32xf32>
    %144 = arith.mulf %139, %141 : vector<8x32xf32>
    %145 = arith.addf %143, %144 : vector<8x32xf32>
    %146 = math.tanh %145 : vector<8x32xf32>
    %147 = arith.mulf %142, %146 : vector<8x32xf32>
    %148 = vector.extract_strided_slice %6 {offsets = [56, 0], sizes = [8, 128], strides = [1, 1]} : vector<64x128xf32> to vector<8x128xf32>
    %cst_23 = arith.constant dense<0.000000e+00> : vector<8x128xf32>
    %149 = tpu.matmul %147, %1, %cst_23 {dimension_numbers = #tpu.dot_dimension_numbers<[1], [0], [0], [1], [0, 0, 1, 1], [], []>} : vector<8x32xf32>, vector<32x128xf32>, vector<8x128xf32> -> vector<8x128xf32>
    %150 = arith.addf %148, %149 : vector<8x128xf32>
    %151 = math.tanh %150 : vector<8x128xf32>
    %152 = arith.negf %150 : vector<8x128xf32>
    %153 = math.exp %152 : vector<8x128xf32>
    %cst_24 = arith.constant 1.000000e+00 : f32
    %154 = vector.broadcast %cst_24 : f32 to vector<8x128xf32>
    %155 = arith.addf %154, %153 : vector<8x128xf32>
    %156 = arith.divf %154, %155 : vector<8x128xf32>
    %157 = arith.select %12, %151, %156 : vector<8x128xi1>, vector<8x128xf32>
    %158 = vector.extract_strided_slice %157 {offsets = [0, 0], sizes = [8, 32], strides = [1, 1]} : vector<8x128xf32> to vector<8x32xf32>
    %159 = vector.extract_strided_slice %157 {offsets = [0, 32], sizes = [8, 32], strides = [1, 1]} : vector<8x128xf32> to vector<8x32xf32>
    %160 = vector.extract_strided_slice %157 {offsets = [0, 64], sizes = [8, 32], strides = [1, 1]} : vector<8x128xf32> to vector<8x32xf32>
    %161 = vector.extract_strided_slice %157 {offsets = [0, 96], sizes = [8, 32], strides = [1, 1]} : vector<8x128xf32> to vector<8x32xf32>
    %162 = arith.mulf %159, %145 : vector<8x32xf32>
    %163 = arith.mulf %158, %160 : vector<8x32xf32>
    %164 = arith.addf %162, %163 : vector<8x32xf32>
    %165 = math.tanh %164 : vector<8x32xf32>
    %166 = arith.mulf %161, %165 : vector<8x32xf32>
    %c0_25 = arith.constant 0 : index
    %c0_26 = arith.constant 0 : index
    %167 = vector.load %arg4[%c0_25, %c0_26] : memref<1x32xf32, #tpu.memory_space<vmem>>, vector<1x32xf32>
    %168 = vector.broadcast %167 : vector<1x32xf32> to vector<8x32xf32>
    %169 = arith.mulf %166, %168 : vector<8x32xf32>
    %cst_27 = arith.constant dense<0.000000e+00> : vector<8xf32>
    %170 = vector.multi_reduction <add>, %169, %cst_27 [1] : vector<8x32xf32> to vector<8xf32>
    %171 = vector.shape_cast %170 : vector<8xf32> to vector<8x1xf32>
    %172 = vector.shape_cast %171 : vector<8x1xf32> to vector<8x1xf32>
    %173 = vector.broadcast %172 : vector<8x1xf32> to vector<8x128xf32>
    %c0_28 = arith.constant 0 : index
    %c0_29 = arith.constant 0 : index
    %174 = vector.load %arg5[%c0_28, %c0_29] : memref<1x128xf32, #tpu.memory_space<vmem>>, vector<1x128xf32>
    %175 = vector.broadcast %174 : vector<1x128xf32> to vector<8x128xf32>
    %176 = arith.addf %173, %175 : vector<8x128xf32>
    %c0_30 = arith.constant 0 : index
    %c0_31 = arith.constant 0 : index
    %177 = vector.load %arg6[%c0_30, %c0_31] : memref<8x128xf32, #tpu.memory_space<vmem>>, vector<8x128xf32>
    tpu.vector_store %arg6[%c0_30, %c0_31], %176 {strides = array<i32>} : memref<8x128xf32, #tpu.memory_space<vmem>>, vector<8x128xf32>,
    return
  }
}

</mosaic_0001>

<llo_original>
// kernel: tpu_custom_call.1
$region0: #{tpu_custom_call.1}
  #allocation0 [shape = 'u32[]', space=smem, size = 0x4, offset = 0x4, fixed_abs, tag = 'smem constant byte address 0x4 - core index']
  #allocation1 [shape = 'u32[144,128]{1,0:T(1,128)}', space=vmem, size = 0x12000, scoped, tag = 'internal scratch']
  %s0 = inlined_call_operand.vmem [shape: f32[64,16], index: 0, kind: input, shape index: {}]
  %s1 = inlined_call_operand.vmem [shape: f32[16,128], index: 1, kind: input, shape index: {}]
  %s2 = inlined_call_operand.vmem [shape: f32[32,128], index: 2, kind: input, shape index: {}]
  %s3 = inlined_call_operand.vmem [shape: f32[1,128], index: 3, kind: input, shape index: {}]
  %s4 = inlined_call_operand.vmem [shape: f32[1,32], index: 4, kind: input, shape index: {}]
  %s5 = inlined_call_operand.vmem [shape: f32[1,128], index: 5, kind: input, shape index: {}]
  %s6 = inlined_call_operand.hbm [shape: f32[8,128], index: 6, kind: output, shape index: {}]
  %s7 = sld [smem:[#allocation0]]
  $region34: #{tpu_custom_call.1} parent=0
    _
  %s9 = ssub.s32 1, %s7
  %s10 = scalar_select 0, %s9, %s7
  $region1: #{tpu_custom_call.1} parent=0
    #allocation2 [shape = 'u8[4096]{0}', space=vmem, size = 0x1000, scoped, tag = 'output window, operand 0, single buffered']
    #allocation3 [shape = 's32[1]{0}', space=sflag, size = 0x4, scoped, tag = 'scoped memory for tpu_custom_call.1']
    %11 = vsyncpa [#allocation3], 0
    // Predicated region
    $region2: #{tpu_custom_call.1} parent=1 // pred_check
      _
    $region3: #{tpu_custom_call.1} parent=1 // pred_check_branch
      %13 = sbr.rel (0) target = $region5
    $region4: #{tpu_custom_call.1} parent=1 // pred_region
      _
    $region5: #{tpu_custom_call.1} parent=1 // pred_fallthru
      _
    // Predicated region
    $region6: #{tpu_custom_call.1} parent=1 // pred_check
      _
    $region7: #{tpu_custom_call.1} parent=1 // pred_check_branch
      %15 = sbr.rel (0) target = $region9
    $region8: #{tpu_custom_call.1} parent=1 // pred_region
      _
    $region9: #{tpu_custom_call.1} parent=1 // pred_fallthru
      _
    // Predicated region
    $region10: #{tpu_custom_call.1} parent=1 // pred_check
      _
    $region11: #{tpu_custom_call.1} parent=1 // pred_check_branch
      %17 = sbr.rel (0) target = $region13
    $region12: #{tpu_custom_call.1} parent=1 // pred_region
      _
    $region13: #{tpu_custom_call.1} parent=1 // pred_fallthru
      _
    // Predicated region
    $region14: #{tpu_custom_call.1} parent=1 // pred_check
      _
    $region15: #{tpu_custom_call.1} parent=1 // pred_check_branch
      %19 = sbr.rel (0) target = $region17
    $region16: #{tpu_custom_call.1} parent=1 // pred_region
      _
    $region17: #{tpu_custom_call.1} parent=1 // pred_fallthru
      _
    // Predicated region
    $region18: #{tpu_custom_call.1} parent=1 // pred_check
      _
    $region19: #{tpu_custom_call.1} parent=1 // pred_check_branch
      %21 = sbr.rel (0) target = $region21
    $region20: #{tpu_custom_call.1} parent=1 // pred_region
      _
    $region21: #{tpu_custom_call.1} parent=1 // pred_fallthru
      _
    // Predicated region
    $region22: #{tpu_custom_call.1} parent=1 // pred_check
      _
    $region23: #{tpu_custom_call.1} parent=1 // pred_check_branch
      %23 = sbr.rel (0) target = $region25
    $region24: #{tpu_custom_call.1} parent=1 // pred_region
      _
    $region25: #{tpu_custom_call.1} parent=1 // pred_fallthru
      _
    %v24 = vld [vmem:[%s1] sm:$0xff]
    %v25 = vld [vmem:[%s1 + $0x8] sm:$0xff]
    %v26 = vld [vmem:[%s2] sm:$0xff]
    %v27 = vld [vmem:[%s2 + $0x8] sm:$0xff]
    %v28 = vld [vmem:[%s2 + $0x10] sm:$0xff]
    %v29 = vld [vmem:[%s2 + $0x18] sm:$0xff]
    %v30 = vld [vmem:[%s3] sm:$0x1]
    %v31 = vld [vmem:[%s0] sm:$0xff]
    %v32 = vld [vmem:[%s0 + $0x8] sm:$0xff]
    %v33 = vld [vmem:[%s0 + $0x10] sm:$0xff]
    %v34 = vld [vmem:[%s0 + $0x18] sm:$0xff]
    %v35 = vld [vmem:[%s0 + $0x20] sm:$0xff]
    %v36 = vld [vmem:[%s0 + $0x28] sm:$0xff]
    %v37 = vld [vmem:[%s0 + $0x30] sm:$0xff]
    %v38 = vld [vmem:[%s0 + $0x38] sm:$0xff]
    %v40 = vlaneseq
    %v41 = vshrl.u32 %v40, 7
    %v42 = vsub.s32 0, %v41
    %v43 = vrot.slane %v30, %v42
    %vm45 = vcmask 130048
    %v47 = vsel %vm45, %v31, 0
    %v50 = vsel %vm45, %v32, 0
    %v53 = vsel %vm45, %v33, 0
    %v56 = vsel %vm45, %v34, 0
    %v59 = vsel %vm45, %v35, 0
    %v62 = vsel %vm45, %v36, 0
    %v65 = vsel %vm45, %v37, 0
    %v68 = vsel %vm45, %v38, 0
    %70 = vmatprep.subr.mxu0 0.0
    %71 = vmatpush1.msra.mxu0 0.0
    %72 = vmatprep.subr.mxu0 0.0
    %73 = vmatpush1.msra.mxu0 0.0
    %74 = vmatprep.subr.mxu0 0.0
    %75 = vmatpush1.msra.mxu0 0.0
    %76 = vmatprep.subr.mxu0 0.0
    %77 = vmatpush1.msra.mxu0 0.0
    %78 = vmatprep.subr.mxu0 0.0
    %79 = vmatpush1.msra.mxu0 0.0
    %80 = vmatprep.subr.mxu0 0.0
    %81 = vmatpush1.msra.mxu0 0.0
    %82 = vmatprep.subr.mxu0 0.0
    %83 = vmatpush1.msra.mxu0 0.0
    %84 = vmatprep.subr.mxu0 0.0
    %85 = vmatpush1.msra.mxu0 0.0
    %86 = vmatprep.subr.mxu0 0.0
    %87 = vmatpush1.msra.mxu0 0.0
    %88 = vmatprep.subr.mxu0 0.0
    %89 = vmatpush1.msra.mxu0 0.0
    %90 = vmatprep.subr.mxu0 0.0
    %91 = vmatpush1.msra.mxu0 0.0
    %92 = vmatprep.subr.mxu0 0.0
    %93 = vmatpush1.msra.mxu0 0.0
    %94 = vmatprep.subr.mxu0 0.0
    %95 = vmatpush1.msra.mxu0 0.0
    %96 = vmatprep.subr.mxu0 0.0
    %97 = vmatpush1.msra.mxu0 0.0
    %98 = vmatprep.subr.mxu0 0.0
    %99 = vmatpush1.msra.mxu0 %v25
    %100 = vmatprep.subr.mxu0 0.0
    %101 = vmatpush1.msra.mxu0 %v24
    %102 = vmatprep.subr.mxu0 0.0
    %103 = vmatpush2.msra.mxu0 0.0
    %104 = vmatprep.subr.mxu0 0.0
    %105 = vmatpush2.msra.mxu0 0.0
    %106 = vmatprep.subr.mxu0 0.0
    %107 = vmatpush2.msra.mxu0 0.0
    %108 = vmatprep.subr.mxu0 0.0
    %109 = vmatpush2.msra.mxu0 0.0
    %110 = vmatprep.subr.mxu0 0.0
    %111 = vmatpush2.msra.mxu0 0.0
    %112 = vmatprep.subr.mxu0 0.0
    %113 = vmatpush2.msra.mxu0 0.0
    %114 = vmatprep.subr.mxu0 0.0
    %115 = vmatpush2.msra.mxu0 0.0
    %116 = vmatprep.subr.mxu0 0.0
    %117 = vmatpush2.msra.mxu0 0.0
    %118 = vmatprep.subr.mxu0 0.0
    %119 = vmatpush2.msra.mxu0 0.0
    %120 = vmatprep.subr.mxu0 0.0
    %121 = vmatpush2.msra.mxu0 0.0
    %122 = vmatprep.subr.mxu0 0.0
    %123 = vmatpush2.msra.mxu0 0.0
    %124 = vmatprep.subr.mxu0 0.0
    %125 = vmatpush2.msra.mxu0 0.0
    %126 = vmatprep.subr.mxu0 0.0
    %127 = vmatpush2.msra.mxu0 0.0
    %128 = vmatprep.subr.mxu0 0.0
    %129 = vmatpush2.msra.mxu0 0.0
    %130 = vmatprep.subr.mxu0 0.0
    %131 = vmatpush2.msra.mxu0 0.0
    %132 = vmatprep.subr.mxu0 0.0
    %133 = vmatpush2.msra.mxu0 0.0
    %134 = vmatprep.mubr.f32.mxu0 0.0
    %135 = vmatmul.mubr.f32.gmra.mxu0 %v47
    %v136 = vpop.f32.mrf.mxu0
    %v137 = vadd.f32 %v43, %v136
    %v138 = vpop.f32.mrf.mxu0
    %139 = vmatprep.mubr.f32.mxu0 0.0
    %140 = vmatmul.mubr.f32.gmra.mxu0 %v50
    %v141 = vpop.f32.mrf.mxu0
    %v142 = vadd.f32 %v43, %v141
    %v143 = vpop.f32.mrf.mxu0
    %144 = vmatprep.mubr.f32.mxu0 0.0
    %145 = vmatmul.mubr.f32.gmra.mxu0 %v53
    %v146 = vpop.f32.mrf.mxu0
    %v147 = vadd.f32 %v43, %v146
    %v148 = vpop.f32.mrf.mxu0
    %149 = vmatprep.mubr.f32.mxu0 0.0
    %150 = vmatmul.mubr.f32.gmra.mxu0 %v56
    %v151 = vpop.f32.mrf.mxu0
    %v152 = vadd.f32 %v43, %v151
    %v153 = vpop.f32.mrf.mxu0
    %154 = vmatprep.mubr.f32.mxu0 0.0
    %155 = vmatmul.mubr.f32.gmra.mxu0 %v59
    %v156 = vpop.f32.mrf.mxu0
    %v157 = vadd.f32 %v43, %v156
    %v158 = vpop.f32.mrf.mxu0
    %159 = vmatprep.mubr.f32.mxu0 0.0
    %160 = vmatmul.mubr.f32.gmra.mxu0 %v62
    %v161 = vpop.f32.mrf.mxu0
    %v162 = vadd.f32 %v43, %v161
    %v163 = vpop.f32.mrf.mxu0
    %164 = vmatprep.mubr.f32.mxu0 0.0
    %165 = vmatmul.mubr.f32.gmra.mxu0 %v65
    %v166 = vpop.f32.mrf.mxu0
    %v167 = vadd.f32 %v43, %v166
    %v168 = vpop.f32.mrf.mxu0
    %169 = vmatprep.mubr.f32.mxu0 0.0
    %170 = vmatmul.mubr.f32.gmra.mxu0 %v68
    %v171 = vpop.f32.mrf.mxu0
    %v172 = vadd.f32 %v43, %v171
    %v173 = vpop.f32.mrf.mxu0
    %174 = vdwg.mxu0
    %v175 = vlaneseq
    %v176 = vand.u32 %v175, 127
    %vm177 = vcmp.ge.s32.totalorder %v176, 64
    %vm178 = vcmp.lt.s32.totalorder %v176, 96
    %vm179 = vmand %vm177, %vm178
    %vm180 = vcmask 261120
    %v182 = vsel %vm180, 0.0, 0
    %184 = vmatprep.subr.mxu0 0.0
    %185 = vmatpush1.msra.mxu0 0.0
    %186 = vmatprep.subr.mxu0 0.0
    %187 = vmatpush1.msra.mxu0 0.0
    %188 = vmatprep.subr.mxu0 0.0
    %189 = vmatpush1.msra.mxu0 0.0
    %190 = vmatprep.subr.mxu0 0.0
    %191 = vmatpush1.msra.mxu0 0.0
    %192 = vmatprep.subr.mxu0 0.0
    %193 = vmatpush1.msra.mxu0 0.0
    %194 = vmatprep.subr.mxu0 0.0
    %195 = vmatpush1.msra.mxu0 0.0
    %196 = vmatprep.subr.mxu0 0.0
    %197 = vmatpush1.msra.mxu0 0.0
    %198 = vmatprep.subr.mxu0 0.0
    %199 = vmatpush1.msra.mxu0 0.0
    %200 = vmatprep.subr.mxu0 0.0
    %201 = vmatpush1.msra.mxu0 0.0
    %202 = vmatprep.subr.mxu0 0.0
    %203 = vmatpush1.msra.mxu0 0.0
    %204 = vmatprep.subr.mxu0 0.0
    %205 = vmatpush1.msra.mxu0 0.0
    %206 = vmatprep.subr.mxu0 0.0
    %207 = vmatpush1.msra.mxu0 0.0
    %208 = vmatprep.subr.mxu0 0.0
    %209 = vmatpush1.msra.mxu0 %v29
    %210 = vmatprep.subr.mxu0 0.0
    %211 = vmatpush1.msra.mxu0 %v28
    %212 = vmatprep.subr.mxu0 0.0
    %213 = vmatpush1.msra.mxu0 %v27
    %214 = vmatprep.subr.mxu0 0.0
    %215 = vmatpush1.msra.mxu0 %v26
    %216 = vmatprep.subr.mxu0 0.0
    %217 = vmatpush2.msra.mxu0 0.0
    %218 = vmatprep.subr.mxu0 0.0
    %219 = vmatpush2.msra.mxu0 0.0
    %220 = vmatprep.subr.mxu0 0.0
    %221 = vmatpush2.msra.mxu0 0.0
    %222 = vmatprep.subr.mxu0 0.0
    %223 = vmatpush2.msra.mxu0 0.0
    %224 = vmatprep.subr.mxu0 0.0
    %225 = vmatpush2.msra.mxu0 0.0
    %226 = vmatprep.subr.mxu0 0.0
    %227 = vmatpush2.msra.mxu0 0.0
    %228 = vmatprep.subr.mxu0 0.0
    %229 = vmatpush2.msra.mxu0 0.0
    %230 = vmatprep.subr.mxu0 0.0
    %231 = vmatpush2.msra.mxu0 0.0
    %232 = vmatprep.subr.mxu0 0.0
    %233 = vmatpush2.msra.mxu0 0.0
    %234 = vmatprep.subr.mxu0 0.0
    %235 = vmatpush2.msra.mxu0 0.0
    %236 = vmatprep.subr.mxu0 0.0
    %237 = vmatpush2.msra.mxu0 0.0
    %238 = vmatprep.subr.mxu0 0.0
    %239 = vmatpush2.msra.mxu0 0.0
    %240 = vmatprep.subr.mxu0 0.0
    %241 = vmatpush2.msra.mxu0 0.0
    %242 = vmatprep.subr.mxu0 0.0
    %243 = vmatpush2.msra.mxu0 0.0
    %244 = vmatprep.subr.mxu0 0.0
    %245 = vmatpush2.msra.mxu0 0.0
    %246 = vmatprep.subr.mxu0 0.0
    %247 = vmatpush2.msra.mxu0 0.0
    %248 = vmatprep.mubr.f32.mxu0 0.0
    %249 = vmatmul.mubr.f32.gmra.mxu0 %v182
    %v250 = vpop.f32.mrf.mxu0
    %v251 = vadd.f32 0.0, %v250
    %v252 = vpop.f32.mrf.mxu0
    %253 = vdwg.mxu0
    %v254 = vadd.f32 %v137, %v251
    %v255 = vtanh.pop %v254
    %v256 = vxor.u32 %v254, 2147483648
    %v257 = vmul.f32 %v256, 1.442695
    %v258 = vpow.pop %v257
    %v259 = vadd.f32 %v258, 1.0
    %v260 = vrcp.pop %v259
    %v261 = vmul.f32 1.0, %v260
    %v262 = vsel %vm179, %v255, %v261
    %v263 = vmul.f32 %v262, 0.0
    %265 = vrot.lane.b32.xlu0 %v262, 64
    %v266 = vpop.permute.xlu0 %265
    %v268 = vmul.f32 %v262, %v266
    %270 = vrot.lane.b32.xlu0 %v268, 32
    %v271 = vpop.permute.xlu0 %270
    %v273 = vadd.f32 %v263, %v271
    %v274 = vtanh.pop %v273
    %276 = vrot.lane.b32.xlu0 %v274, 64
    %v277 = vpop.permute.xlu0 %276
    %v279 = vmul.f32 %v262, %v277
    %281 = vrot.lane.b32.xlu0 %v279, 32
    %v282 = vpop.permute.xlu0 %281
    %v283 = vsel %vm180, %v282, 0
    %285 = vmatprep.subr.mxu0 0.0
    %286 = vmatpush1.msra.mxu0 0.0
    %287 = vmatprep.subr.mxu0 0.0
    %288 = vmatpush1.msra.mxu0 0.0
    %289 = vmatprep.subr.mxu0 0.0
    %290 = vmatpush1.msra.mxu0 0.0
    %291 = vmatprep.subr.mxu0 0.0
    %292 = vmatpush1.msra.mxu0 0.0
    %293 = vmatprep.subr.mxu0 0.0
    %294 = vmatpush1.msra.mxu0 0.0
    %295 = vmatprep.subr.mxu0 0.0
    %296 = vmatpush1.msra.mxu0 0.0
    %297 = vmatprep.subr.mxu0 0.0
    %298 = vmatpush1.msra.mxu0 0.0
    %299 = vmatprep.subr.mxu0 0.0
    %300 = vmatpush1.msra.mxu0 0.0
    %301 = vmatprep.subr.mxu0 0.0
    %302 = vmatpush1.msra.mxu0 0.0
    %303 = vmatprep.subr.mxu0 0.0
    %304 = vmatpush1.msra.mxu0 0.0
    %305 = vmatprep.subr.mxu0 0.0
    %306 = vmatpush1.msra.mxu0 0.0
    %307 = vmatprep.subr.mxu0 0.0
    %308 = vmatpush1.msra.mxu0 0.0
    %309 = vmatprep.subr.mxu0 0.0
    %310 = vmatpush1.msra.mxu0 %v29
    %311 = vmatprep.subr.mxu0 0.0
    %312 = vmatpush1.msra.mxu0 %v28
    %313 = vmatprep.subr.mxu0 0.0
    %314 = vmatpush1.msra.mxu0 %v27
    %315 = vmatprep.subr.mxu0 0.0
    %316 = vmatpush1.msra.mxu0 %v26
    %317 = vmatprep.subr.mxu0 0.0
    %318 = vmatpush2.msra.mxu0 0.0
    %319 = vmatprep.subr.mxu0 0.0
    %320 = vmatpush2.msra.mxu0 0.0
    %321 = vmatprep.subr.mxu0 0.0
    %322 = vmatpush2.msra.mxu0 0.0
    %323 = vmatprep.subr.mxu0 0.0
    %324 = vmatpush2.msra.mxu0 0.0
    %325 = vmatprep.subr.mxu0 0.0
    %326 = vmatpush2.msra.mxu0 0.0
    %327 = vmatprep.subr.mxu0 0.0
    %328 = vmatpush2.msra.mxu0 0.0
    %329 = vmatprep.subr.mxu0 0.0
    %330 = vmatpush2.msra.mxu0 0.0
    %331 = vmatprep.subr.mxu0 0.0
    %332 = vmatpush2.msra.mxu0 0.0
    %333 = vmatprep.subr.mxu0 0.0
    %334 = vmatpush2.msra.mxu0 0.0
    %335 = vmatprep.subr.mxu0 0.0
    %336 = vmatpush2.msra.mxu0 0.0
    %337 = vmatprep.subr.mxu0 0.0
    %338 = vmatpush2.msra.mxu0 0.0
    %339 = vmatprep.subr.mxu0 0.0
    %340 = vmatpush2.msra.mxu0 0.0
    %341 = vmatprep.subr.mxu0 0.0
    %342 = vmatpush2.msra.mxu0 0.0
    %343 = vmatprep.subr.mxu0 0.0
    %344 = vmatpush2.msra.mxu0 0.0
    %345 = vmatprep.subr.mxu0 0.0
    %346 = vmatpush2.msra.mxu0 0.0
    %347 = vmatprep.subr.mxu0 0.0
    %348 = vmatpush2.msra.mxu0 0.0
    %349 = vmatprep.mubr.f32.mxu0 0.0
    %350 = vmatmul.mubr.f32.gmra.mxu0 %v283
    %v351 = vpop.f32.mrf.mxu0
    %v352 = vadd.f32 0.0, %v351
    %v353 = vpop.f32.mrf.mxu0
    %354 = vdwg.mxu0
    %v355 = vadd.f32 %v142, %v352
    %v356 = vtanh.pop %v355
    %v357 = vxor.u32 %v355, 2147483648
    %v358 = vmul.f32 %v357, 1.442695
    %v359 = vpow.pop %v358
    %v360 = vadd.f32 %v359, 1.0
    %v361 = vrcp.pop %v360
    %v362 = vmul.f32 1.0, %v361
    %v363 = vsel %vm179, %v356, %v362
    %v364 = vmul.f32 %v363, %v273
    %366 = vrot.lane.b32.xlu0 %v363, 64
    %v367 = vpop.permute.xlu0 %366
    %v369 = vmul.f32 %v363, %v367
    %371 = vrot.lane.b32.xlu0 %v369, 32
    %v372 = vpop.permute.xlu0 %371
    %v374 = vadd.f32 %v364, %v372
    %v375 = vtanh.pop %v374
    %377 = vrot.lane.b32.xlu0 %v375, 64
    %v378 = vpop.permute.xlu0 %377
    %v380 = vmul.f32 %v363, %v378
    %382 = vrot.lane.b32.xlu0 %v380, 32
    %v383 = vpop.permute.xlu0 %382
    %v384 = vsel %vm180, %v383, 0
    %386 = vmatprep.subr.mxu0 0.0
    %387 = vmatpush1.msra.mxu0 0.0
    %388 = vmatprep.subr.mxu0 0.0
    %389 = vmatpush1.msra.mxu0 0.0
    %390 = vmatprep.subr.mxu0 0.0
    %391 = vmatpush1.msra.mxu0 0.0
    %392 = vmatprep.subr.mxu0 0.0
    %393 = vmatpush1.msra.mxu0 0.0
    %394 = vmatprep.subr.mxu0 0.0
    %395 = vmatpush1.msra.mxu0 0.0
    %396 = vmatprep.subr.mxu0 0.0
    %397 = vmatpush1.msra.mxu0 0.0
    %398 = vmatprep.subr.mxu0 0.0
    %399 = vmatpush1.msra.mxu0 0.0
    %400 = vmatprep.subr.mxu0 0.0
    %401 = vmatpush1.msra.mxu0 0.0
    %402 = vmatprep.subr.mxu0 0.0
    %403 = vmatpush1.msra.mxu0 0.0
    %404 = vmatprep.subr.mxu0 0.0
    %405 = vmatpush1.msra.mxu0 0.0
    %406 = vmatprep.subr.mxu0 0.0
    %407 = vmatpush1.msra.mxu0 0.0
    %408 = vmatprep.subr.mxu0 0.0
    %409 = vmatpush1.msra.mxu0 0.0
    %410 = vmatprep.subr.mxu0 0.0
    %411 = vmatpush1.msra.mxu0 %v29
    %412 = vmatprep.subr.mxu0 0.0
    %413 = vmatpush1.msra.mxu0 %v28
    %414 = vmatprep.subr.mxu0 0.0
    %415 = vmatpush1.msra.mxu0 %v27
    %416 = vmatprep.subr.mxu0 0.0
    %417 = vmatpush1.msra.mxu0 %v26
    %418 = vmatprep.subr.mxu0 0.0
    %419 = vmatpush2.msra.mxu0 0.0
    %420 = vmatprep.subr.mxu0 0.0
    %421 = vmatpush2.msra.mxu0 0.0
    %422 = vmatprep.subr.mxu0 0.0
    %423 = vmatpush2.msra.mxu0 0.0
    %424 = vmatprep.subr.mxu0 0.0
    %425 = vmatpush2.msra.mxu0 0.0
    %426 = vmatprep.subr.mxu0 0.0
    %427 = vmatpush2.msra.mxu0 0.0
    %428 = vmatprep.subr.mxu0 0.0
    %429 = vmatpush2.msra.mxu0 0.0
    %430 = vmatprep.subr.mxu0 0.0
    %431 = vmatpush2.msra.mxu0 0.0
    %432 = vmatprep.subr.mxu0 0.0
    %433 = vmatpush2.msra.mxu0 0.0
    %434 = vmatprep.subr.mxu0 0.0
    %435 = vmatpush2.msra.mxu0 0.0
    %436 = vmatprep.subr.mxu0 0.0
    %437 = vmatpush2.msra.mxu0 0.0
    %438 = vmatprep.subr.mxu0 0.0
    %439 = vmatpush2.msra.mxu0 0.0
    %440 = vmatprep.subr.mxu0 0.0
    %441 = vmatpush2.msra.mxu0 0.0
    %442 = vmatprep.subr.mxu0 0.0
    %443 = vmatpush2.msra.mxu0 0.0
    %444 = vmatprep.subr.mxu0 0.0
    %445 = vmatpush2.msra.mxu0 0.0
    %446 = vmatprep.subr.mxu0 0.0
    %447 = vmatpush2.msra.mxu0 0.0
    %448 = vmatprep.subr.mxu0 0.0
    %449 = vmatpush2.msra.mxu0 0.0
    %450 = vmatprep.mubr.f32.mxu0 0.0
    %451 = vmatmul.mubr.f32.gmra.mxu0 %v384
    %v452 = vpop.f32.mrf.mxu0
    %v453 = vadd.f32 0.0, %v452
    %v454 = vpop.f32.mrf.mxu0
    %455 = vdwg.mxu0
    %v456 = vadd.f32 %v147, %v453
    %v457 = vtanh.pop %v456
    %v458 = vxor.u32 %v456, 2147483648
    %v459 = vmul.f32 %v458, 1.442695
    %v460 = vpow.pop %v459
    %v461 = vadd.f32 %v460, 1.0
    %v462 = vrcp.pop %v461
    %v463 = vmul.f32 1.0, %v462
    %v464 = vsel %vm179, %v457, %v463
    %v465 = vmul.f32 %v464, %v374
    %467 = vrot.lane.b32.xlu0 %v464, 64
    %v468 = vpop.permute.xlu0 %467
    %v470 = vmul.f32 %v464, %v468
    %472 = vrot.lane.b32.xlu0 %v470, 32
    %v473 = vpop.permute.xlu0 %472
    %v475 = vadd.f32 %v465, %v473
    %v476 = vtanh.pop %v475
    %478 = vrot.lane.b32.xlu0 %v476, 64
    %v479 = vpop.permute.xlu0 %478
    %v481 = vmul.f32 %v464, %v479
    %483 = vrot.lane.b32.xlu0 %v481, 32
    %v484 = vpop.permute.xlu0 %483
    %v485 = vsel %vm180, %v484, 0
    %487 = vmatprep.subr.mxu0 0.0
    %488 = vmatpush1.msra.mxu0 0.0
    %489 = vmatprep.subr.mxu0 0.0
    %490 = vmatpush1.msra.mxu0 0.0
    %491 = vmatprep.subr.mxu0 0.0
    %492 = vmatpush1.msra.mxu0 0.0
    %493 = vmatprep.subr.mxu0 0.0
    %494 = vmatpush1.msra.mxu0 0.0
    %495 = vmatprep.subr.mxu0 0.0
    %496 = vmatpush1.msra.mxu0 0.0
    %497 = vmatprep.subr.mxu0 0.0
    %498 = vmatpush1.msra.mxu0 0.0
    %499 = vmatprep.subr.mxu0 0.0
    %500 = vmatpush1.msra.mxu0 0.0
    %501 = vmatprep.subr.mxu0 0.0
    %502 = vmatpush1.msra.mxu0 0.0
    %503 = vmatprep.subr.mxu0 0.0
    %504 = vmatpush1.msra.mxu0 0.0
    %505 = vmatprep.subr.mxu0 0.0
    %506 = vmatpush1.msra.mxu0 0.0
    %507 = vmatprep.subr.mxu0 0.0
    %508 = vmatpush1.msra.mxu0 0.0
    %509 = vmatprep.subr.mxu0 0.0
    %510 = vmatpush1.msra.mxu0 0.0
    %511 = vmatprep.subr.mxu0 0.0
    %512 = vmatpush1.msra.mxu0 %v29
    %513 = vmatprep.subr.mxu0 0.0
    %514 = vmatpush1.msra.mxu0 %v28
    %515 = vmatprep.subr.mxu0 0.0
    %516 = vmatpush1.msra.mxu0 %v27
    %517 = vmatprep.subr.mxu0 0.0
    %518 = vmatpush1.msra.mxu0 %v26
    %519 = vmatprep.subr.mxu0 0.0
    %520 = vmatpush2.msra.mxu0 0.0
    %521 = vmatprep.subr.mxu0 0.0
    %522 = vmatpush2.msra.mxu0 0.0
    %523 = vmatprep.subr.mxu0 0.0
    %524 = vmatpush2.msra.mxu0 0.0
    %525 = vmatprep.subr.mxu0 0.0
    %526 = vmatpush2.msra.mxu0 0.0
    %527 = vmatprep.subr.mxu0 0.0
    %528 = vmatpush2.msra.mxu0 0.0
    %529 = vmatprep.subr.mxu0 0.0
    %530 = vmatpush2.msra.mxu0 0.0
    %531 = vmatprep.subr.mxu0 0.0
    %532 = vmatpush2.msra.mxu0 0.0
    %533 = vmatprep.subr.mxu0 0.0
    %534 = vmatpush2.msra.mxu0 0.0
    %535 = vmatprep.subr.mxu0 0.0
    %536 = vmatpush2.msra.mxu0 0.0
    %537 = vmatprep.subr.mxu0 0.0
    %538 = vmatpush2.msra.mxu0 0.0
    %539 = vmatprep.subr.mxu0 0.0
    %540 = vmatpush2.msra.mxu0 0.0
    %541 = vmatprep.subr.mxu0 0.0
    %542 = vmatpush2.msra.mxu0 0.0
    %543 = vmatprep.subr.mxu0 0.0
    %544 = vmatpush2.msra.mxu0 0.0
    %545 = vmatprep.subr.mxu0 0.0
    %546 = vmatpush2.msra.mxu0 0.0
    %547 = vmatprep.subr.mxu0 0.0
    %548 = vmatpush2.msra.mxu0 0.0
    %549 = vmatprep.subr.mxu0 0.0
    %550 = vmatpush2.msra.mxu0 0.0
    %551 = vmatprep.mubr.f32.mxu0 0.0
    %552 = vmatmul.mubr.f32.gmra.mxu0 %v485
    %v553 = vpop.f32.mrf.mxu0
    %v554 = vadd.f32 0.0, %v553
    %v555 = vpop.f32.mrf.mxu0
    %556 = vdwg.mxu0
    %v557 = vadd.f32 %v152, %v554
    %v558 = vtanh.pop %v557
    %v559 = vxor.u32 %v557, 2147483648
    %v560 = vmul.f32 %v559, 1.442695
    %v561 = vpow.pop %v560
    %v562 = vadd.f32 %v561, 1.0
    %v563 = vrcp.pop %v562
    %v564 = vmul.f32 1.0, %v563
    %v565 = vsel %vm179, %v558, %v564
    %v566 = vmul.f32 %v565, %v475
    %568 = vrot.lane.b32.xlu0 %v565, 64
    %v569 = vpop.permute.xlu0 %568
    %v571 = vmul.f32 %v565, %v569
    %573 = vrot.lane.b32.xlu0 %v571, 32
    %v574 = vpop.permute.xlu0 %573
    %v576 = vadd.f32 %v566, %v574
    %v577 = vtanh.pop %v576
    %579 = vrot.lane.b32.xlu0 %v577, 64
    %v580 = vpop.permute.xlu0 %579
    %v582 = vmul.f32 %v565, %v580
    %584 = vrot.lane.b32.xlu0 %v582, 32
    %v585 = vpop.permute.xlu0 %584
    %v586 = vsel %vm180, %v585, 0
    %588 = vmatprep.subr.mxu0 0.0
    %589 = vmatpush1.msra.mxu0 0.0
    %590 = vmatprep.subr.mxu0 0.0
    %591 = vmatpush1.msra.mxu0 0.0
    %592 = vmatprep.subr.mxu0 0.0
    %593 = vmatpush1.msra.mxu0 0.0
    %594 = vmatprep.subr.mxu0 0.0
    %595 = vmatpush1.msra.mxu0 0.0
    %596 = vmatprep.subr.mxu0 0.0
    %597 = vmatpush1.msra.mxu0 0.0
    %598 = vmatprep.subr.mxu0 0.0
    %599 = vmatpush1.msra.mxu0 0.0
    %600 = vmatprep.subr.mxu0 0.0
    %601 = vmatpush1.msra.mxu0 0.0
    %602 = vmatprep.subr.mxu0 0.0
    %603 = vmatpush1.msra.mxu0 0.0
    %604 = vmatprep.subr.mxu0 0.0
    %605 = vmatpush1.msra.mxu0 0.0
    %606 = vmatprep.subr.mxu0 0.0
    %607 = vmatpush1.msra.mxu0 0.0
    %608 = vmatprep.subr.mxu0 0.0
    %609 = vmatpush1.msra.mxu0 0.0
    %610 = vmatprep.subr.mxu0 0.0
    %611 = vmatpush1.msra.mxu0 0.0
    %612 = vmatprep.subr.mxu0 0.0
    %613 = vmatpush1.msra.mxu0 %v29
    %614 = vmatprep.subr.mxu0 0.0
    %615 = vmatpush1.msra.mxu0 %v28
    %616 = vmatprep.subr.mxu0 0.0
    %617 = vmatpush1.msra.mxu0 %v27
    %618 = vmatprep.subr.mxu0 0.0
    %619 = vmatpush1.msra.mxu0 %v26
    %620 = vmatprep.subr.mxu0 0.0
    %621 = vmatpush2.msra.mxu0 0.0
    %622 = vmatprep.subr.mxu0 0.0
    %623 = vmatpush2.msra.mxu0 0.0
    %624 = vmatprep.subr.mxu0 0.0
    %625 = vmatpush2.msra.mxu0 0.0
    %626 = vmatprep.subr.mxu0 0.0
    %627 = vmatpush2.msra.mxu0 0.0
    %628 = vmatprep.subr.mxu0 0.0
    %629 = vmatpush2.msra.mxu0 0.0
    %630 = vmatprep.subr.mxu0 0.0
    %631 = vmatpush2.msra.mxu0 0.0
    %632 = vmatprep.subr.mxu0 0.0
    %633 = vmatpush2.msra.mxu0 0.0
    %634 = vmatprep.subr.mxu0 0.0
    %635 = vmatpush2.msra.mxu0 0.0
    %636 = vmatprep.subr.mxu0 0.0
    %637 = vmatpush2.msra.mxu0 0.0
    %638 = vmatprep.subr.mxu0 0.0
    %639 = vmatpush2.msra.mxu0 0.0
    %640 = vmatprep.subr.mxu0 0.0
    %641 = vmatpush2.msra.mxu0 0.0
    %642 = vmatprep.subr.mxu0 0.0
    %643 = vmatpush2.msra.mxu0 0.0
    %644 = vmatprep.subr.mxu0 0.0
    %645 = vmatpush2.msra.mxu0 0.0
    %646 = vmatprep.subr.mxu0 0.0
    %647 = vmatpush2.msra.mxu0 0.0
    %648 = vmatprep.subr.mxu0 0.0
    %649 = vmatpush2.msra.mxu0 0.0
    %650 = vmatprep.subr.mxu0 0.0
    %651 = vmatpush2.msra.mxu0 0.0
    %652 = vmatprep.mubr.f32.mxu0 0.0
    %653 = vmatmul.mubr.f32.gmra.mxu0 %v586
    %v654 = vpop.f32.mrf.mxu0
    %v655 = vadd.f32 0.0, %v654
    %v656 = vpop.f32.mrf.mxu0
    %657 = vdwg.mxu0
    %v658 = vadd.f32 %v157, %v655
    %v659 = vtanh.pop %v658
    %v660 = vxor.u32 %v658, 2147483648
    %v661 = vmul.f32 %v660, 1.442695
    %v662 = vpow.pop %v661
    %v663 = vadd.f32 %v662, 1.0
    %v664 = vrcp.pop %v663
    %v665 = vmul.f32 1.0, %v664
    %v666 = vsel %vm179, %v659, %v665
    %v667 = vmul.f32 %v666, %v576
    %669 = vrot.lane.b32.xlu0 %v666, 64
    %v670 = vpop.permute.xlu0 %669
    %v672 = vmul.f32 %v666, %v670
    %674 = vrot.lane.b32.xlu0 %v672, 32
    %v675 = vpop.permute.xlu0 %674
    %v677 = vadd.f32 %v667, %v675
    %v678 = vtanh.pop %v677
    %680 = vrot.lane.b32.xlu0 %v678, 64
    %v681 = vpop.permute.xlu0 %680
    %v683 = vmul.f32 %v666, %v681
    %685 = vrot.lane.b32.xlu0 %v683, 32
    %v686 = vpop.permute.xlu0 %685
    %v687 = vsel %vm180, %v686, 0
    %689 = vmatprep.subr.mxu0 0.0
    %690 = vmatpush1.msra.mxu0 0.0
    %691 = vmatprep.subr.mxu0 0.0
    %692 = vmatpush1.msra.mxu0 0.0
    %693 = vmatprep.subr.mxu0 0.0
    %694 = vmatpush1.msra.mxu0 0.0
    %695 = vmatprep.subr.mxu0 0.0
    %696 = vmatpush1.msra.mxu0 0.0
    %697 = vmatprep.subr.mxu0 0.0
    %698 = vmatpush1.msra.mxu0 0.0
    %699 = vmatprep.subr.mxu0 0.0
    %700 = vmatpush1.msra.mxu0 0.0
    %701 = vmatprep.subr.mxu0 0.0
    %702 = vmatpush1.msra.mxu0 0.0
    %703 = vmatprep.subr.mxu0 0.0
    %704 = vmatpush1.msra.mxu0 0.0
    %705 = vmatprep.subr.mxu0 0.0
    %706 = vmatpush1.msra.mxu0 0.0
    %707 = vmatprep.subr.mxu0 0.0
    %708 = vmatpush1.msra.mxu0 0.0
    %709 = vmatprep.subr.mxu0 0.0
    %710 = vmatpush1.msra.mxu0 0.0
    %711 = vmatprep.subr.mxu0 0.0
    %712 = vmatpush1.msra.mxu0 0.0
    %713 = vmatprep.subr.mxu0 0.0
    %714 = vmatpush1.msra.mxu0 %v29
    %715 = vmatprep.subr.mxu0 0.0
    %716 = vmatpush1.msra.mxu0 %v28
    %717 = vmatprep.subr.mxu0 0.0
    %718 = vmatpush1.msra.mxu0 %v27
    %719 = vmatprep.subr.mxu0 0.0
    %720 = vmatpush1.msra.mxu0 %v26
    %721 = vmatprep.subr.mxu0 0.0
    %722 = vmatpush2.msra.mxu0 0.0
    %723 = vmatprep.subr.mxu0 0.0
    %724 = vmatpush2.msra.mxu0 0.0
    %725 = vmatprep.subr.mxu0 0.0
    %726 = vmatpush2.msra.mxu0 0.0
    %727 = vmatprep.subr.mxu0 0.0
    %728 = vmatpush2.msra.mxu0 0.0
    %729 = vmatprep.subr.mxu0 0.0
    %730 = vmatpush2.msra.mxu0 0.0
    %731 = vmatprep.subr.mxu0 0.0
    %732 = vmatpush2.msra.mxu0 0.0
    %733 = vmatprep.subr.mxu0 0.0
    %734 = vmatpush2.msra.mxu0 0.0
    %735 = vmatprep.subr.mxu0 0.0
    %736 = vmatpush2.msra.mxu0 0.0
    %737 = vmatprep.subr.mxu0 0.0
    %738 = vmatpush2.msra.mxu0 0.0
    %739 = vmatprep.subr.mxu0 0.0
    %740 = vmatpush2.msra.mxu0 0.0
    %741 = vmatprep.subr.mxu0 0.0
    %742 = vmatpush2.msra.mxu0 0.0
    %743 = vmatprep.subr.mxu0 0.0
    %744 = vmatpush2.msra.mxu0 0.0
    %745 = vmatprep.subr.mxu0 0.0
    %746 = vmatpush2.msra.mxu0 0.0
    %747 = vmatprep.subr.mxu0 0.0
    %748 = vmatpush2.msra.mxu0 0.0
    %749 = vmatprep.subr.mxu0 0.0
    %750 = vmatpush2.msra.mxu0 0.0
    %751 = vmatprep.subr.mxu0 0.0
    %752 = vmatpush2.msra.mxu0 0.0
    %753 = vmatprep.mubr.f32.mxu0 0.0
    %754 = vmatmul.mubr.f32.gmra.mxu0 %v687
    %v755 = vpop.f32.mrf.mxu0
    %v756 = vadd.f32 0.0, %v755
    %v757 = vpop.f32.mrf.mxu0
    %758 = vdwg.mxu0
    %v759 = vadd.f32 %v162, %v756
    %v760 = vtanh.pop %v759
    %v761 = vxor.u32 %v759, 2147483648
    %v762 = vmul.f32 %v761, 1.442695
    %v763 = vpow.pop %v762
    %v764 = vadd.f32 %v763, 1.0
    %v765 = vrcp.pop %v764
    %v766 = vmul.f32 1.0, %v765
    %v767 = vsel %vm179, %v760, %v766
    %v768 = vmul.f32 %v767, %v677
    %770 = vrot.lane.b32.xlu0 %v767, 64
    %v771 = vpop.permute.xlu0 %770
    %v773 = vmul.f32 %v767, %v771
    %775 = vrot.lane.b32.xlu0 %v773, 32
    %v776 = vpop.permute.xlu0 %775
    %v778 = vadd.f32 %v768, %v776
    %v779 = vtanh.pop %v778
    %781 = vrot.lane.b32.xlu0 %v779, 64
    %v782 = vpop.permute.xlu0 %781
    %v784 = vmul.f32 %v767, %v782
    %786 = vrot.lane.b32.xlu0 %v784, 32
    %v787 = vpop.permute.xlu0 %786
    %v788 = vsel %vm180, %v787, 0
    %790 = vmatprep.subr.mxu0 0.0
    %791 = vmatpush1.msra.mxu0 0.0
    %792 = vmatprep.subr.mxu0 0.0
    %793 = vmatpush1.msra.mxu0 0.0
    %794 = vmatprep.subr.mxu0 0.0
    %795 = vmatpush1.msra.mxu0 0.0
    %796 = vmatprep.subr.mxu0 0.0
    %797 = vmatpush1.msra.mxu0 0.0
    %798 = vmatprep.subr.mxu0 0.0
    %799 = vmatpush1.msra.mxu0 0.0
    %800 = vmatprep.subr.mxu0 0.0
    %801 = vmatpush1.msra.mxu0 0.0
    %802 = vmatprep.subr.mxu0 0.0
    %803 = vmatpush1.msra.mxu0 0.0
    %804 = vmatprep.subr.mxu0 0.0
    %805 = vmatpush1.msra.mxu0 0.0
    %806 = vmatprep.subr.mxu0 0.0
    %807 = vmatpush1.msra.mxu0 0.0
    %808 = vmatprep.subr.mxu0 0.0
    %809 = vmatpush1.msra.mxu0 0.0
    %810 = vmatprep.subr.mxu0 0.0
    %811 = vmatpush1.msra.mxu0 0.0
    %812 = vmatprep.subr.mxu0 0.0
    %813 = vmatpush1.msra.mxu0 0.0
    %814 = vmatprep.subr.mxu0 0.0
    %815 = vmatpush1.msra.mxu0 %v29
    %816 = vmatprep.subr.mxu0 0.0
    %817 = vmatpush1.msra.mxu0 %v28
    %818 = vmatprep.subr.mxu0 0.0
    %819 = vmatpush1.msra.mxu0 %v27
    %820 = vmatprep.subr.mxu0 0.0
    %821 = vmatpush1.msra.mxu0 %v26
    %822 = vmatprep.subr.mxu0 0.0
    %823 = vmatpush2.msra.mxu0 0.0
    %824 = vmatprep.subr.mxu0 0.0
    %825 = vmatpush2.msra.mxu0 0.0
    %826 = vmatprep.subr.mxu0 0.0
    %827 = vmatpush2.msra.mxu0 0.0
    %828 = vmatprep.subr.mxu0 0.0
    %829 = vmatpush2.msra.mxu0 0.0
    %830 = vmatprep.subr.mxu0 0.0
    %831 = vmatpush2.msra.mxu0 0.0
    %832 = vmatprep.subr.mxu0 0.0
    %833 = vmatpush2.msra.mxu0 0.0
    %834 = vmatprep.subr.mxu0 0.0
    %835 = vmatpush2.msra.mxu0 0.0
    %836 = vmatprep.subr.mxu0 0.0
    %837 = vmatpush2.msra.mxu0 0.0
    %838 = vmatprep.subr.mxu0 0.0
    %839 = vmatpush2.msra.mxu0 0.0
    %840 = vmatprep.subr.mxu0 0.0
    %841 = vmatpush2.msra.mxu0 0.0
    %842 = vmatprep.subr.mxu0 0.0
    %843 = vmatpush2.msra.mxu0 0.0
    %844 = vmatprep.subr.mxu0 0.0
    %845 = vmatpush2.msra.mxu0 0.0
    %846 = vmatprep.subr.mxu0 0.0
    %847 = vmatpush2.msra.mxu0 0.0
    %848 = vmatprep.subr.mxu0 0.0
    %849 = vmatpush2.msra.mxu0 0.0
    %850 = vmatprep.subr.mxu0 0.0
    %851 = vmatpush2.msra.mxu0 0.0
    %852 = vmatprep.subr.mxu0 0.0
    %853 = vmatpush2.msra.mxu0 0.0
    %854 = vmatprep.mubr.f32.mxu0 0.0
    %855 = vmatmul.mubr.f32.gmra.mxu0 %v788
    %v856 = vpop.f32.mrf.mxu0
    %v857 = vadd.f32 0.0, %v856
    %v858 = vpop.f32.mrf.mxu0
    %859 = vdwg.mxu0
    %v860 = vadd.f32 %v167, %v857
    %v861 = vtanh.pop %v860
    %v862 = vxor.u32 %v860, 2147483648
    %v863 = vmul.f32 %v862, 1.442695
    %v864 = vpow.pop %v863
    %v865 = vadd.f32 %v864, 1.0
    %v866 = vrcp.pop %v865
    %v867 = vmul.f32 1.0, %v866
    %v868 = vsel %vm179, %v861, %v867
    %v869 = vmul.f32 %v868, %v778
    %871 = vrot.lane.b32.xlu0 %v868, 64
    %v872 = vpop.permute.xlu0 %871
    %v874 = vmul.f32 %v868, %v872
    %876 = vrot.lane.b32.xlu0 %v874, 32
    %v877 = vpop.permute.xlu0 %876
    %v879 = vadd.f32 %v869, %v877
    %v880 = vtanh.pop %v879
    %882 = vrot.lane.b32.xlu0 %v880, 64
    %v883 = vpop.permute.xlu0 %882
    %v885 = vmul.f32 %v868, %v883
    %887 = vrot.lane.b32.xlu0 %v885, 32
    %v888 = vpop.permute.xlu0 %887
    %v889 = vsel %vm180, %v888, 0
    %891 = vmatprep.subr.mxu0 0.0
    %892 = vmatpush1.msra.mxu0 0.0
    %893 = vmatprep.subr.mxu0 0.0
    %894 = vmatpush1.msra.mxu0 0.0
    %895 = vmatprep.subr.mxu0 0.0
    %896 = vmatpush1.msra.mxu0 0.0
    %897 = vmatprep.subr.mxu0 0.0
    %898 = vmatpush1.msra.mxu0 0.0
    %899 = vmatprep.subr.mxu0 0.0
    %900 = vmatpush1.msra.mxu0 0.0
    %901 = vmatprep.subr.mxu0 0.0
    %902 = vmatpush1.msra.mxu0 0.0
    %903 = vmatprep.subr.mxu0 0.0
    %904 = vmatpush1.msra.mxu0 0.0
    %905 = vmatprep.subr.mxu0 0.0
    %906 = vmatpush1.msra.mxu0 0.0
    %907 = vmatprep.subr.mxu0 0.0
    %908 = vmatpush1.msra.mxu0 0.0
    %909 = vmatprep.subr.mxu0 0.0
    %910 = vmatpush1.msra.mxu0 0.0
    %911 = vmatprep.subr.mxu0 0.0
    %912 = vmatpush1.msra.mxu0 0.0
    %913 = vmatprep.subr.mxu0 0.0
    %914 = vmatpush1.msra.mxu0 0.0
    %915 = vmatprep.subr.mxu0 0.0
    %916 = vmatpush1.msra.mxu0 %v29
    %917 = vmatprep.subr.mxu0 0.0
    %918 = vmatpush1.msra.mxu0 %v28
    %919 = vmatprep.subr.mxu0 0.0
    %920 = vmatpush1.msra.mxu0 %v27
    %921 = vmatprep.subr.mxu0 0.0
    %922 = vmatpush1.msra.mxu0 %v26
    %923 = vmatprep.subr.mxu0 0.0
    %924 = vmatpush2.msra.mxu0 0.0
    %925 = vmatprep.subr.mxu0 0.0
    %926 = vmatpush2.msra.mxu0 0.0
    %927 = vmatprep.subr.mxu0 0.0
    %928 = vmatpush2.msra.mxu0 0.0
    %929 = vmatprep.subr.mxu0 0.0
    %930 = vmatpush2.msra.mxu0 0.0
    %931 = vmatprep.subr.mxu0 0.0
    %932 = vmatpush2.msra.mxu0 0.0
    %933 = vmatprep.subr.mxu0 0.0
    %934 = vmatpush2.msra.mxu0 0.0
    %935 = vmatprep.subr.mxu0 0.0
    %936 = vmatpush2.msra.mxu0 0.0
    %937 = vmatprep.subr.mxu0 0.0
    %938 = vmatpush2.msra.mxu0 0.0
    %939 = vmatprep.subr.mxu0 0.0
    %940 = vmatpush2.msra.mxu0 0.0
    %941 = vmatprep.subr.mxu0 0.0
    %942 = vmatpush2.msra.mxu0 0.0
    %943 = vmatprep.subr.mxu0 0.0
    %944 = vmatpush2.msra.mxu0 0.0
    %945 = vmatprep.subr.mxu0 0.0
    %946 = vmatpush2.msra.mxu0 0.0
    %947 = vmatprep.subr.mxu0 0.0
    %948 = vmatpush2.msra.mxu0 0.0
    %949 = vmatprep.subr.mxu0 0.0
    %950 = vmatpush2.msra.mxu0 0.0
    %951 = vmatprep.subr.mxu0 0.0
    %952 = vmatpush2.msra.mxu0 0.0
    %953 = vmatprep.subr.mxu0 0.0
    %954 = vmatpush2.msra.mxu0 0.0
    %955 = vmatprep.mubr.f32.mxu0 0.0
    %956 = vmatmul.mubr.f32.gmra.mxu0 %v889
    %v957 = vpop.f32.mrf.mxu0
    %v958 = vadd.f32 0.0, %v957
    %v959 = vpop.f32.mrf.mxu0
    %960 = vdwg.mxu0
    %v961 = vadd.f32 %v172, %v958
    %v962 = vtanh.pop %v961
    %v963 = vxor.u32 %v961, 2147483648
    %v964 = vmul.f32 %v963, 1.442695
    %v965 = vpow.pop %v964
    %v966 = vadd.f32 %v965, 1.0
    %v967 = vrcp.pop %v966
    %v968 = vmul.f32 1.0, %v967
    %v969 = vsel %vm179, %v962, %v968
    %v970 = vmul.f32 %v969, %v879
    %972 = vrot.lane.b32.xlu0 %v969, 64
    %v973 = vpop.permute.xlu0 %972
    %v975 = vmul.f32 %v969, %v973
    %977 = vrot.lane.b32.xlu0 %v975, 32
    %v978 = vpop.permute.xlu0 %977
    %v980 = vadd.f32 %v970, %v978
    %v981 = vtanh.pop %v980
    %983 = vrot.lane.b32.xlu0 %v981, 64
    %v984 = vpop.permute.xlu0 %983
    %v986 = vmul.f32 %v969, %v984
    %v987 = vld [vmem:[%s4] sm:$0x1]
    %v989 = vlaneseq
    %v990 = vshrl.u32 %v989, 7
    %v991 = vsub.s32 0, %v990
    %v992 = vrot.slane %v987, %v991
    %993 = vrot.lane.b32.xlu0 %v992, 96
    %v994 = vpop.permute.xlu0 %993
    %v996 = vmul.f32 %v986, %v994
    %998 = vrot.lane.b32.xlu0 %v996, 32
    %v999 = vpop.permute.xlu0 %998
    %v1001 = vsel %vm180, %v999, 0.0
    %1002 = vadd.xlane.f32.xlu0 %v1001
    %v1003 = vpop.xlane.xlu0 %1002
    %v1004 = vld [vmem:[%s5] sm:$0x1]
    %v1006 = vlaneseq
    %v1007 = vshrl.u32 %v1006, 7
    %v1008 = vsub.s32 0, %v1007
    %v1009 = vrot.slane %v1004, %v1008
    %v1011 = vadd.f32 %v1003, %v1009
    %1012 = vst [vmem:[#allocation2] sm:$0xff] %v1011
    // Predicated region
    $region26: #{tpu_custom_call.1} parent=1 // pred_check
      _
    $region27: #{tpu_custom_call.1} parent=1 // pred_check_branch
      %1014 = sbr.rel (0) target = $region29
    $region28: #{tpu_custom_call.1} parent=1 // pred_region
      %s1016 = ssub.s32 128, 128
      %1017 = vsyncadd [#allocation3], %s1016
      %s1019 = sshll.u32 [#allocation2], 4
      %s1020 = int_to_ptr.vmem [resolvable:$true] %s1019
      %1022 = dma.vmem_to_hbm [thread:$0]  %s1020, 128, %s6, [#allocation3]
    $region29: #{tpu_custom_call.1} parent=1 // pred_fallthru
      _
    // Predicated region
    $region30: #{tpu_custom_call.1} parent=1 // pred_check
      _
    $region31: #{tpu_custom_call.1} parent=1 // pred_check_branch
      %1024 = sbr.rel (0) target = $region33
    $region32: #{tpu_custom_call.1} parent=1 // pred_region
      %1025 = dma.done [#allocation3], 128
    $region33: #{tpu_custom_call.1} parent=1 // pred_fallthru
      _
    %1026 = vsyncpa [#allocation3], 1

</llo_original>
